<compile_context>
chip_gen: v5e
topology: v5e:2x2
jax: 0.10.0
libtpu: 0.0.40
codegen_flags: <defaults>
</compile_context>

<pallas_src>
import functools

import jax
import jax.numpy as jnp
from jax.experimental import pallas as pl
from jax.experimental.pallas import tpu as pltpu

HIDDEN = 64        # logical hidden width (matches the PyTorch module)
HPAD = 128         # hidden padded to full lane width
OUT_LANES = 128    # lane-dense output slab width


def _round_up(x, m):
    return (x + m - 1) // m * m


def _actor_critic_kernel(action_dim, s_ref, w1_ref, w2_ref, wh_ref, b_ref, out_ref):
    """One batch tile: base MLP + fused actor/critic head, lane-dense output slab."""
    x = s_ref[...]                       # (tile_b, state_dim) f32
    b1 = b_ref[0:1, :]                   # (1, 128) f32
    b2 = b_ref[1:2, :]
    bh = b_ref[2:3, :]

    # base: Linear(state_dim, 64) -> ReLU -> Linear(64, 64) -> ReLU   (padded to 128)
    h = jnp.dot(x.astype(jnp.bfloat16), w1_ref[...],
                preferred_element_type=jnp.float32) + b1
    h = jnp.maximum(h, 0.0)
    h = jnp.dot(h.astype(jnp.bfloat16), w2_ref[...],
                preferred_element_type=jnp.float32) + b2
    h = jnp.maximum(h, 0.0)

    # fused head: columns [0:action_dim) = actor logits, column action_dim = critic value.
    head = jnp.dot(h.astype(jnp.bfloat16), wh_ref[...],
                   preferred_element_type=jnp.float32) + bh

    col = jax.lax.broadcasted_iota(jnp.int32, head.shape, 1)
    logits = jnp.where(col < action_dim, head, jnp.float32(-1e30))
    m = jnp.max(logits, axis=-1, keepdims=True)
    e = jnp.exp(logits - m)              # padded / value columns -> exp(-inf) = 0
    denom = jnp.sum(e, axis=-1, keepdims=True)
    r = pl.reciprocal(denom, approx=True)
    r = r * (2.0 - denom * r)            # one Newton step: keeps sum(probs)==1 at f32 precision
    probs = e * r

    out_ref[...] = jnp.where(col == action_dim, head, probs)


@functools.partial(jax.jit, static_argnames=("action_dim",))
def actor_critic_forward(state, packed, action_dim):
    """state: (B, state_dim) f32.  Returns (probs (B, action_dim), value (B, 1))."""
    b, state_dim = state.shape

    # Batch tile: large enough for pipelining on big RL batches, shrinks for tiny ones.
    tile_b = min(512, _round_up(max(b, 1), 8))
    b_pad = _round_up(b, tile_b)
    if b_pad != b:
        state = jnp.pad(state, ((0, b_pad - b), (0, 0)))

    kernel = functools.partial(_actor_critic_kernel, action_dim)

    out = pl.pallas_call(
        kernel,
        out_shape=jax.ShapeDtypeStruct((b_pad, OUT_LANES), jnp.float32),
        grid=(b_pad // tile_b,),
        in_specs=[
            pl.BlockSpec((tile_b, state_dim), lambda i: (i, 0)),   # state tile (streamed)
            pl.BlockSpec((state_dim, HPAD), lambda i: (0, 0)),     # w1 (resident)
            pl.BlockSpec((HPAD, HPAD), lambda i: (0, 0)),          # w2 (resident)
            pl.BlockSpec((HPAD, OUT_LANES), lambda i: (0, 0)),     # fused head (resident)
            pl.BlockSpec((8, OUT_LANES), lambda i: (0, 0)),        # packed biases (resident)
        ],
        out_specs=pl.BlockSpec((tile_b, OUT_LANES), lambda i: (i, 0)),
        compiler_params=pltpu.CompilerParams(
            dimension_semantics=("parallel",),          # megacore split on v7x
            vmem_limit_bytes=32 * 1024 * 1024,          # explicit; safe on v5e/v6e/v7x
        ),
    )(state, packed["w1p"], packed["w2p"], packed["whp"], packed["bias"])

    probs = out[:b, :action_dim]
    value = out[:b, action_dim:action_dim + 1]
    return probs, value


def init_params(key, state_dim, action_dim, hidden=HIDDEN):
    """torch.nn.Linear-style init (uniform +/- 1/sqrt(fan_in)); weights (in, out), biases (1, out)."""
    def linear(k, fan_in, fan_out):
        kw, kb = jax.random.split(k)
        bound = 1.0 / jnp.sqrt(jnp.float32(fan_in))
        w = jax.random.uniform(kw, (fan_in, fan_out), jnp.float32, -bound, bound)
        b = jax.random.uniform(kb, (1, fan_out), jnp.float32, -bound, bound)
        return w, b

    k1, k2, k3, k4 = jax.random.split(key, 4)
    w1, b1 = linear(k1, state_dim, hidden)
    w2, b2 = linear(k2, hidden, hidden)
    wa, ba = linear(k3, hidden, action_dim)
    wc, bc = linear(k4, hidden, 1)
    return dict(w1=w1, b1=b1, w2=w2, b2=b2, wa=wa, ba=ba, wc=wc, bc=bc)


def pack_params(params, action_dim):
    """Zero-pad hidden to 128, fuse actor+critic head, pack biases; weights -> bf16."""
    state_dim = params["w1"].shape[0]

    w1p = jnp.zeros((state_dim, HPAD), jnp.float32).at[:, :HIDDEN].set(params["w1"])
    w2p = jnp.zeros((HPAD, HPAD), jnp.float32).at[:HIDDEN, :HIDDEN].set(params["w2"])

    whp = jnp.zeros((HPAD, OUT_LANES), jnp.float32)
    whp = whp.at[:HIDDEN, :action_dim].set(params["wa"])
    whp = whp.at[:HIDDEN, action_dim:action_dim + 1].set(params["wc"])

    bias = jnp.zeros((8, OUT_LANES), jnp.float32)
    bias = bias.at[0, :HIDDEN].set(params["b1"][0])
    bias = bias.at[1, :HIDDEN].set(params["b2"][0])
    bias = bias.at[2, :action_dim].set(params["ba"][0])
    bias = bias.at[2, action_dim].set(params["bc"][0, 0])

    return dict(
        w1p=w1p.astype(jnp.bfloat16),
        w2p=w2p.astype(jnp.bfloat16),
        whp=whp.astype(jnp.bfloat16),
        bias=bias,
    )


def _reference_forward(state, p):
    """Pure-JAX f32 reference of the PyTorch forward."""
    h = jnp.maximum(state @ p["w1"] + p["b1"], 0.0)
    h = jnp.maximum(h @ p["w2"] + p["b2"], 0.0)
    logits = h @ p["wa"] + p["ba"]
    probs = jax.nn.softmax(logits, axis=-1)
    value = h @ p["wc"] + p["bc"]
    return probs, value


if __name__ == "__main__":
    key = jax.random.PRNGKey(0)
    k_state, k_params = jax.random.split(key)

    batch, state_dim, action_dim = 8, 16, 4
    state = jax.random.normal(k_state, (batch, state_dim), jnp.float32)
    params = init_params(k_params, state_dim, action_dim)
    packed = pack_params(params, action_dim)

    probs, value = actor_critic_forward(state, packed, action_dim)
    jax.block_until_ready((probs, value))

    ref_probs, ref_value = _reference_forward(state, params)
    assert probs.shape == (batch, action_dim)
    assert value.shape == (batch, 1)
    # bf16 MXU operands (f32 accumulate) -> compare against f32 reference at bf16 tolerance.
    assert jnp.allclose(probs, ref_probs, atol=5e-2, rtol=5e-2)
    assert jnp.allclose(value, ref_value, atol=5e-2, rtol=5e-2)
    # softmax itself is done in f32 with a Newton-refined reciprocal: exact sum-to-1.
    assert jnp.allclose(jnp.sum(probs, axis=-1), 1.0, atol=1e-5)

    print("KERNEL_OK")
</pallas_src>

<mosaic_0001>
module attributes {stable_mosaic.version = 11 : i64} {
  func.func @_actor_critic_kernel(%arg0: i32, %arg1: memref<8x16xf32, #tpu.memory_space<vmem>>, %arg2: memref<16x128xbf16, #tpu.memory_space<vmem>>, %arg3: memref<128x128xbf16, #tpu.memory_space<vmem>>, %arg4: memref<128x128xbf16, #tpu.memory_space<vmem>>, %arg5: memref<8x128xf32, #tpu.memory_space<vmem>>, %arg6: memref<8x128xf32, #tpu.memory_space<vmem>>) attributes {dimension_semantics = [#tpu.dimension_semantics<parallel>], iteration_bounds = array<i64: 1>, scalar_prefetch = 0 : i64, scratch_operands = 0 : i64, tpu.core_type = #tpu.core_type<tc>, window_params = [{transform_indices = @transform_0, window_bounds = array<i64: 8, 16>}, {pipeline_mode = #tpu.pipeline_mode<synchronous>, transform_indices = @transform_1, window_bounds = array<i64: 16, 128>}, {pipeline_mode = #tpu.pipeline_mode<synchronous>, transform_indices = @transform_2, window_bounds = array<i64: 128, 128>}, {pipeline_mode = #tpu.pipeline_mode<synchronous>, transform_indices = @transform_3, window_bounds = array<i64: 128, 128>}, {pipeline_mode = #tpu.pipeline_mode<synchronous>, transform_indices = @transform_4, window_bounds = array<i64: 8, 128>}, {transform_indices = @transform_5, window_bounds = array<i64: 8, 128>}]} {
    %c0 = arith.constant 0 : index
    %c0_0 = arith.constant 0 : index
    %0 = vector.load %arg1[%c0, %c0_0] : memref<8x16xf32, #tpu.memory_space<vmem>>, vector<8x16xf32>
    %c0_1 = arith.constant 0 : index
    %c0_2 = arith.constant 0 : index
    %1 = vector.load %arg5[%c0_1, %c0_2] : memref<8x128xf32, #tpu.memory_space<vmem>>, vector<1x128xf32>
    %c1 = arith.constant 1 : index
    %c0_3 = arith.constant 0 : index
    %2 = vector.load %arg5[%c1, %c0_3] : memref<8x128xf32, #tpu.memory_space<vmem>>, vector<1x128xf32>
    %c2 = arith.constant 2 : index
    %c0_4 = arith.constant 0 : index
    %3 = vector.load %arg5[%c2, %c0_4] : memref<8x128xf32, #tpu.memory_space<vmem>>, vector<1x128xf32>
    %4 = arith.truncf %0 : vector<8x16xf32> to vector<8x16xbf16>
    %c0_5 = arith.constant 0 : index
    %c0_6 = arith.constant 0 : index
    %5 = vector.load %arg2[%c0_5, %c0_6] : memref<16x128xbf16, #tpu.memory_space<vmem>>, vector<16x128xbf16>
    %cst = arith.constant dense<0.000000e+00> : vector<8x128xf32>
    %6 = tpu.matmul %4, %5, %cst {dimension_numbers = #tpu.dot_dimension_numbers<[1], [0], [0], [1], [0, 0, 1, 1], [], []>} : vector<8x16xbf16>, vector<16x128xbf16>, vector<8x128xf32> -> vector<8x128xf32>
    %7 = vector.broadcast %1 : vector<1x128xf32> to vector<8x128xf32>
    %8 = arith.addf %6, %7 : vector<8x128xf32>
    %cst_7 = arith.constant 0.000000e+00 : f32
    %9 = vector.broadcast %cst_7 : f32 to vector<8x128xf32>
    %10 = arith.maximumf %8, %9 : vector<8x128xf32>
    %11 = arith.truncf %10 : vector<8x128xf32> to vector<8x128xbf16>
    %c0_8 = arith.constant 0 : index
    %c0_9 = arith.constant 0 : index
    %12 = vector.load %arg3[%c0_8, %c0_9] : memref<128x128xbf16, #tpu.memory_space<vmem>>, vector<128x128xbf16>
    %cst_10 = arith.constant dense<0.000000e+00> : vector<8x128xf32>
    %13 = tpu.matmul %11, %12, %cst_10 {dimension_numbers = #tpu.dot_dimension_numbers<[1], [0], [0], [1], [0, 0, 1, 1], [], []>} : vector<8x128xbf16>, vector<128x128xbf16>, vector<8x128xf32> -> vector<8x128xf32>
    %14 = vector.broadcast %2 : vector<1x128xf32> to vector<8x128xf32>
    %15 = arith.addf %13, %14 : vector<8x128xf32>
    %cst_11 = arith.constant 0.000000e+00 : f32
    %16 = vector.broadcast %cst_11 : f32 to vector<8x128xf32>
    %17 = arith.maximumf %15, %16 : vector<8x128xf32>
    %18 = arith.truncf %17 : vector<8x128xf32> to vector<8x128xbf16>
    %c0_12 = arith.constant 0 : index
    %c0_13 = arith.constant 0 : index
    %19 = vector.load %arg4[%c0_12, %c0_13] : memref<128x128xbf16, #tpu.memory_space<vmem>>, vector<128x128xbf16>
    %cst_14 = arith.constant dense<0.000000e+00> : vector<8x128xf32>
    %20 = tpu.matmul %18, %19, %cst_14 {dimension_numbers = #tpu.dot_dimension_numbers<[1], [0], [0], [1], [0, 0, 1, 1], [], []>} : vector<8x128xbf16>, vector<128x128xbf16>, vector<8x128xf32> -> vector<8x128xf32>
    %21 = vector.broadcast %3 : vector<1x128xf32> to vector<8x128xf32>
    %22 = arith.addf %20, %21 : vector<8x128xf32>
    %23 = tpu.iota {dimensions = array<i32: 1>} : vector<8x128xi32>
    %c4_i32 = arith.constant 4 : i32
    %24 = vector.broadcast %c4_i32 : i32 to vector<8x128xi32>
    %25 = arith.cmpi slt, %23, %24 : vector<8x128xi32>
    %cst_15 = arith.constant -1.000000e+30 : f32
    %26 = vector.broadcast %cst_15 : f32 to vector<8x128xf32>
    %27 = arith.select %25, %22, %26 : vector<8x128xi1>, vector<8x128xf32>
    %cst_16 = arith.constant dense<0xFF800000> : vector<8xf32>
    %28 = vector.multi_reduction <maximumf>, %27, %cst_16 [1] : vector<8x128xf32> to vector<8xf32>
    %29 = vector.shape_cast %28 : vector<8xf32> to vector<8x1xf32>
    %30 = vector.broadcast %29 : vector<8x1xf32> to vector<8x128xf32>
    %31 = arith.subf %27, %30 : vector<8x128xf32>
    %32 = math.exp %31 : vector<8x128xf32>
    %cst_17 = arith.constant dense<0.000000e+00> : vector<8xf32>
    %33 = vector.multi_reduction <add>, %32, %cst_17 [1] : vector<8x128xf32> to vector<8xf32>
    %34 = vector.shape_cast %33 : vector<8xf32> to vector<8x1xf32>
    %35 = tpu.reciprocal %34 {approx = true} : vector<8x1xf32> -> vector<8x1xf32>
    %36 = arith.mulf %34, %35 : vector<8x1xf32>
    %cst_18 = arith.constant 2.000000e+00 : f32
    %37 = vector.broadcast %cst_18 : f32 to vector<8x1xf32>
    %38 = arith.subf %37, %36 : vector<8x1xf32>
    %39 = arith.mulf %35, %38 : vector<8x1xf32>
    %40 = vector.broadcast %39 : vector<8x1xf32> to vector<8x128xf32>
    %41 = arith.mulf %32, %40 : vector<8x128xf32>
    %c4_i32_19 = arith.constant 4 : i32
    %42 = vector.broadcast %c4_i32_19 : i32 to vector<8x128xi32>
    %43 = arith.cmpi eq, %23, %42 : vector<8x128xi32>
    %44 = arith.select %43, %22, %41 : vector<8x128xi1>, vector<8x128xf32>
    %c0_20 = arith.constant 0 : index
    %c0_21 = arith.constant 0 : index
    %45 = vector.load %arg6[%c0_20, %c0_21] : memref<8x128xf32, #tpu.memory_space<vmem>>, vector<8x128xf32>
    tpu.vector_store %arg6[%c0_20, %c0_21], %44 {strides = array<i32>} : memref<8x128xf32, #tpu.memory_space<vmem>>, vector<8x128xf32>,
    return
  }
  func.func @transform_0(%arg0: i32) -> (i32, i32) {
    %c0_i32 = arith.constant 0 : i32
    %c0_i32_0 = arith.constant 0 : i32
    return %arg0, %c0_i32 : i32, i32
  }
  func.func @transform_1(%arg0: i32) -> (i32, i32) {
    %c0_i32 = arith.constant 0 : i32
    %c0_i32_0 = arith.constant 0 : i32
    %c0_i32_1 = arith.constant 0 : i32
    return %c0_i32, %c0_i32_0 : i32, i32
  }
  func.func @transform_2(%arg0: i32) -> (i32, i32) {
    %c0_i32 = arith.constant 0 : i32
    %c0_i32_0 = arith.constant 0 : i32
    %c0_i32_1 = arith.constant 0 : i32
    return %c0_i32, %c0_i32_0 : i32, i32
  }
  func.func @transform_3(%arg0: i32) -> (i32, i32) {
    %c0_i32 = arith.constant 0 : i32
    %c0_i32_0 = arith.constant 0 : i32
    %c0_i32_1 = arith.constant 0 : i32
    return %c0_i32, %c0_i32_0 : i32, i32
  }
  func.func @transform_4(%arg0: i32) -> (i32, i32) {
    %c0_i32 = arith.constant 0 : i32
    %c0_i32_0 = arith.constant 0 : i32
    %c0_i32_1 = arith.constant 0 : i32
    return %c0_i32, %c0_i32_0 : i32, i32
  }
  func.func @transform_5(%arg0: i32) -> (i32, i32) {
    %c0_i32 = arith.constant 0 : i32
    %c0_i32_0 = arith.constant 0 : i32
    return %arg0, %c0_i32 : i32, i32
  }
}

</mosaic_0001>

<llo_original>
// kernel: actor_critic_forward.1
$region0: #{actor_critic_forward.1}
  #allocation0 [shape = 'u32[]', space=smem, size = 0x4, offset = 0x4, fixed_abs, tag = 'smem constant byte address 0x4 - core index']
  #allocation1 [shape = 'u32[72,128]{1,0:T(1,128)}', space=vmem, size = 0x9000, scoped, tag = 'internal scratch']
  %s0 = inlined_call_operand.hbm [shape: f32[8,16], index: 0, kind: input, shape index: {}]
  %s1 = inlined_call_operand.hbm [shape: bf16[16,128], index: 1, kind: input, shape index: {}]
  %s2 = inlined_call_operand.hbm [shape: bf16[128,128], index: 2, kind: input, shape index: {}]
  %s3 = inlined_call_operand.hbm [shape: bf16[128,128], index: 3, kind: input, shape index: {}]
  %s4 = inlined_call_operand.hbm [shape: f32[8,128], index: 4, kind: input, shape index: {}]
  %s5 = inlined_call_operand.vmem [shape: f32[8,128], index: 5, kind: output, shape index: {}]
  %s6 = sld [smem:[#allocation0]]
  $region50: #{actor_critic_forward.1} parent=0
    _
  %s8 = ssub.s32 1, %s6
  %s9 = scalar_select 0, %s8, %s6
  $region1: #{actor_critic_forward.1} parent=0
    #allocation2 [shape = 'u8[4096]{0}', space=vmem, size = 0x1000, scoped, tag = 'input window, operand 0, single buffered']
    #allocation3 [shape = 's32[1]{0}', space=sflag, size = 0x4, scoped, tag = 'scoped memory for actor_critic_forward.1']
    #allocation4 [shape = 'u8[4096]{0}', space=vmem, size = 0x1000, scoped, tag = 'input window, operand 1, single buffered']
    #allocation5 [shape = 's32[1]{0}', space=sflag, size = 0x4, scoped, tag = 'scoped memory for actor_critic_forward.1']
    #allocation6 [shape = 'u8[32768]{0}', space=vmem, size = 0x8000, scoped, tag = 'input window, operand 2, single buffered']
    #allocation7 [shape = 'u8[32768]{0}', space=vmem, size = 0x8000, scoped, tag = 'input window, operand 3, single buffered']
    #allocation8 [shape = 's32[1]{0}', space=sflag, size = 0x4, scoped, tag = 'scoped memory for actor_critic_forward.1']
    #allocation9 [shape = 'u8[4096]{0}', space=vmem, size = 0x1000, scoped, tag = 'input window, operand 4, single buffered']
    %10 = vsyncpa [#allocation3], 0
    %11 = vsyncpa [#allocation5], 0
    %12 = vsyncpa [#allocation8], 0
    // Predicated region
    $region2: #{actor_critic_forward.1} parent=1 // pred_check
      _
    $region3: #{actor_critic_forward.1} parent=1 // pred_check_branch
      %14 = sbr.rel (0) target = $region5
    $region4: #{actor_critic_forward.1} parent=1 // pred_region
      %16 = vsyncadd [#allocation3], 0
      %s18 = sshll.u32 %s0, 4
      %s19 = int_to_ptr.hbm [resolvable:$true] %s18
      %s20 = sshll.u32 [#allocation2], 4
      %s21 = int_to_ptr.vmem [resolvable:$true] %s20
      %23 = dma.hbm_to_vmem [thread:$0]  %s19, 128, %s21, [#allocation3]
    $region5: #{actor_critic_forward.1} parent=1 // pred_fallthru
      _
    // Predicated region
    $region6: #{actor_critic_forward.1} parent=1 // pred_check
      _
    $region7: #{actor_critic_forward.1} parent=1 // pred_check_branch
      %25 = sbr.rel (0) target = $region9
    $region8: #{actor_critic_forward.1} parent=1 // pred_region
      %27 = vsyncadd [#allocation5], 0
      %s28 = sshll.u32 %s1, 4
      %s29 = int_to_ptr.hbm [resolvable:$true] %s28
      %s30 = sshll.u32 [#allocation4], 4
      %s31 = int_to_ptr.vmem [resolvable:$true] %s30
      %36 = dma.hbm_to_vmem [thread:$0]  %s29, 128, %s31, [#allocation5], 64, 64, 4
    $region9: #{actor_critic_forward.1} parent=1 // pred_fallthru
      _
    // Predicated region
    $region10: #{actor_critic_forward.1} parent=1 // pred_check
      _
    $region11: #{actor_critic_forward.1} parent=1 // pred_check_branch
      %38 = sbr.rel (0) target = $region13
    $region12: #{actor_critic_forward.1} parent=1 // pred_region
      %40 = vsyncadd [#allocation5], 0
      %s41 = sshll.u32 %s2, 4
      %s42 = int_to_ptr.hbm [resolvable:$true] %s41
      %s43 = sshll.u32 [#allocation6], 4
      %s44 = int_to_ptr.vmem [resolvable:$true] %s43
      %49 = dma.hbm_to_vmem [thread:$0]  %s42, 1024, %s44, [#allocation5], 64, 64, 4
    $region13: #{actor_critic_forward.1} parent=1 // pred_fallthru
      _
    // Predicated region
    $region14: #{actor_critic_forward.1} parent=1 // pred_check
      _
    $region15: #{actor_critic_forward.1} parent=1 // pred_check_branch
      %51 = sbr.rel (0) target = $region17
    $region16: #{actor_critic_forward.1} parent=1 // pred_region
      %53 = vsyncadd [#allocation8], 0
      %s54 = sshll.u32 %s3, 4
      %s55 = int_to_ptr.hbm [resolvable:$true] %s54
      %s56 = sshll.u32 [#allocation7], 4
      %s57 = int_to_ptr.vmem [resolvable:$true] %s56
      %62 = dma.hbm_to_vmem [thread:$0]  %s55, 1024, %s57, [#allocation8], 64, 64, 4
    $region17: #{actor_critic_forward.1} parent=1 // pred_fallthru
      _
    // Predicated region
    $region18: #{actor_critic_forward.1} parent=1 // pred_check
      _
    $region19: #{actor_critic_forward.1} parent=1 // pred_check_branch
      %64 = sbr.rel (0) target = $region21
    $region20: #{actor_critic_forward.1} parent=1 // pred_region
      %66 = vsyncadd [#allocation8], 0
      %s68 = sshll.u32 %s4, 4
      %s69 = int_to_ptr.hbm [resolvable:$true] %s68
      %s70 = sshll.u32 [#allocation9], 4
      %s71 = int_to_ptr.vmem [resolvable:$true] %s70
      %73 = dma.hbm_to_vmem [thread:$0]  %s69, 128, %s71, [#allocation8]
    $region21: #{actor_critic_forward.1} parent=1 // pred_fallthru
      _
    // Predicated region
    $region22: #{actor_critic_forward.1} parent=1 // pred_check
      _
    $region23: #{actor_critic_forward.1} parent=1 // pred_check_branch
      %75 = sbr.rel (0) target = $region25
    $region24: #{actor_critic_forward.1} parent=1 // pred_region
      %77 = dma.done [#allocation3], 128
    $region25: #{actor_critic_forward.1} parent=1 // pred_fallthru
      _
    // Predicated region
    $region26: #{actor_critic_forward.1} parent=1 // pred_check
      _
    $region27: #{actor_critic_forward.1} parent=1 // pred_check_branch
      %79 = sbr.rel (0) target = $region29
    $region28: #{actor_critic_forward.1} parent=1 // pred_region
      %81 = dma.done [#allocation5], 128
    $region29: #{actor_critic_forward.1} parent=1 // pred_fallthru
      _
    // Predicated region
    $region30: #{actor_critic_forward.1} parent=1 // pred_check
      _
    $region31: #{actor_critic_forward.1} parent=1 // pred_check_branch
      %83 = sbr.rel (0) target = $region33
    $region32: #{actor_critic_forward.1} parent=1 // pred_region
      %85 = dma.done [#allocation5], 1024
    $region33: #{actor_critic_forward.1} parent=1 // pred_fallthru
      _
    // Predicated region
    $region34: #{actor_critic_forward.1} parent=1 // pred_check
      _
    $region35: #{actor_critic_forward.1} parent=1 // pred_check_branch
      %87 = sbr.rel (0) target = $region37
    $region36: #{actor_critic_forward.1} parent=1 // pred_region
      %89 = dma.done [#allocation8], 1024
    $region37: #{actor_critic_forward.1} parent=1 // pred_fallthru
      _
    // Predicated region
    $region38: #{actor_critic_forward.1} parent=1 // pred_check
      _
    $region39: #{actor_critic_forward.1} parent=1 // pred_check_branch
      %91 = sbr.rel (0) target = $region41
    $region40: #{actor_critic_forward.1} parent=1 // pred_region
      %93 = dma.done [#allocation8], 128
    $region41: #{actor_critic_forward.1} parent=1 // pred_fallthru
      _
    %v95 = vld [vmem:[#allocation2] sm:$0xff]
    %v96 = vld [vmem:[#allocation9] sm:$0x1]
    %v97 = vld [vmem:[#allocation9 + $0x1] sm:$0x1]
    %v98 = vld [vmem:[#allocation9 + $0x2] sm:$0x1]
    %v99 = vpack.c.bf16 %v95, %v95
    %v100 = vld [vmem:[#allocation4] sm:$0xf]
    %v101 = vld [vmem:[#allocation4 + $0x4] sm:$0xf]
    %v102 = vperm.slane %v96, 0
    %v105 = vunpack.c.l.b16 %v100
    %v106 = vunpack.c.l.b16 %v101
    %v107 = vpack.c.b16 %v106, %v105
    %vm109 = vcmask 130048
    %v111 = vsel %vm109, %v99, 0
    %113 = vmatpush.bf16.msra.mxu0 0
    %114 = vmatpush.bf16.msra.mxu0 0
    %115 = vmatpush.bf16.msra.mxu0 0
    %116 = vmatpush.bf16.msra.mxu0 0
    %117 = vmatpush.bf16.msra.mxu0 0
    %118 = vmatpush.bf16.msra.mxu0 0
    %119 = vmatpush.bf16.msra.mxu0 0
    %120 = vmatpush.bf16.msra.mxu0 %v107
    %121 = vmatmul.bf16.gmra.mxu0 %v111
    %v122 = vpop.f32.mrf.mxu0
    %v123 = vadd.f32 %v102, %v122
    %v124 = vpop.f32.mrf.mxu0
    %125 = vdwg.mxu0
    %v126 = vmax.f32 %v123, 0.0
    %v127 = vpack.c.bf16 %v126, %v126
    %v128 = vld [vmem:[#allocation6] sm:$0xf]
    %v129 = vld [vmem:[#allocation6 + $0x4] sm:$0xf]
    %v130 = vld [vmem:[#allocation6 + $0x8] sm:$0xf]
    %v131 = vld [vmem:[#allocation6 + $0xc] sm:$0xf]
    %v132 = vld [vmem:[#allocation6 + $0x10] sm:$0xf]
    %v133 = vld [vmem:[#allocation6 + $0x14] sm:$0xf]
    %v134 = vld [vmem:[#allocation6 + $0x18] sm:$0xf]
    %v135 = vld [vmem:[#allocation6 + $0x1c] sm:$0xf]
    %v136 = vld [vmem:[#allocation6 + $0x20] sm:$0xf]
    %v137 = vld [vmem:[#allocation6 + $0x24] sm:$0xf]
    %v138 = vld [vmem:[#allocation6 + $0x28] sm:$0xf]
    %v139 = vld [vmem:[#allocation6 + $0x2c] sm:$0xf]
    %v140 = vld [vmem:[#allocation6 + $0x30] sm:$0xf]
    %v141 = vld [vmem:[#allocation6 + $0x34] sm:$0xf]
    %v142 = vld [vmem:[#allocation6 + $0x38] sm:$0xf]
    %v143 = vld [vmem:[#allocation6 + $0x3c] sm:$0xf]
    %v144 = vperm.slane %v97, 0
    %v161 = vunpack.c.l.b16 %v128
    %v162 = vunpack.c.l.b16 %v129
    %v163 = vunpack.c.l.b16 %v130
    %v164 = vunpack.c.l.b16 %v131
    %v165 = vunpack.c.l.b16 %v132
    %v166 = vunpack.c.l.b16 %v133
    %v167 = vunpack.c.l.b16 %v134
    %v168 = vunpack.c.l.b16 %v135
    %v169 = vunpack.c.l.b16 %v136
    %v170 = vunpack.c.l.b16 %v137
    %v171 = vunpack.c.l.b16 %v138
    %v172 = vunpack.c.l.b16 %v139
    %v173 = vunpack.c.l.b16 %v140
    %v174 = vunpack.c.l.b16 %v141
    %v175 = vunpack.c.l.b16 %v142
    %v176 = vunpack.c.l.b16 %v143
    %v177 = vpack.c.b16 %v162, %v161
    %v178 = vpack.c.b16 %v164, %v163
    %v179 = vpack.c.b16 %v166, %v165
    %v180 = vpack.c.b16 %v168, %v167
    %v181 = vpack.c.b16 %v170, %v169
    %v182 = vpack.c.b16 %v172, %v171
    %v183 = vpack.c.b16 %v174, %v173
    %v184 = vpack.c.b16 %v176, %v175
    %193 = vmatpush.bf16.msra.mxu0 %v184
    %194 = vmatpush.bf16.msra.mxu0 %v183
    %195 = vmatpush.bf16.msra.mxu0 %v182
    %196 = vmatpush.bf16.msra.mxu0 %v181
    %197 = vmatpush.bf16.msra.mxu0 %v180
    %198 = vmatpush.bf16.msra.mxu0 %v179
    %199 = vmatpush.bf16.msra.mxu0 %v178
    %200 = vmatpush.bf16.msra.mxu0 %v177
    %201 = vmatmul.bf16.gmra.mxu0 %v127
    %v202 = vpop.f32.mrf.mxu0
    %v203 = vadd.f32 %v144, %v202
    %v204 = vpop.f32.mrf.mxu0
    %205 = vdwg.mxu0
    %v206 = vmax.f32 %v203, 0.0
    %v207 = vpack.c.bf16 %v206, %v206
    %v208 = vld [vmem:[#allocation7] sm:$0xf]
    %v209 = vld [vmem:[#allocation7 + $0x4] sm:$0xf]
    %v210 = vld [vmem:[#allocation7 + $0x8] sm:$0xf]
    %v211 = vld [vmem:[#allocation7 + $0xc] sm:$0xf]
    %v212 = vld [vmem:[#allocation7 + $0x10] sm:$0xf]
    %v213 = vld [vmem:[#allocation7 + $0x14] sm:$0xf]
    %v214 = vld [vmem:[#allocation7 + $0x18] sm:$0xf]
    %v215 = vld [vmem:[#allocation7 + $0x1c] sm:$0xf]
    %v216 = vld [vmem:[#allocation7 + $0x20] sm:$0xf]
    %v217 = vld [vmem:[#allocation7 + $0x24] sm:$0xf]
    %v218 = vld [vmem:[#allocation7 + $0x28] sm:$0xf]
    %v219 = vld [vmem:[#allocation7 + $0x2c] sm:$0xf]
    %v220 = vld [vmem:[#allocation7 + $0x30] sm:$0xf]
    %v221 = vld [vmem:[#allocation7 + $0x34] sm:$0xf]
    %v222 = vld [vmem:[#allocation7 + $0x38] sm:$0xf]
    %v223 = vld [vmem:[#allocation7 + $0x3c] sm:$0xf]
    %v224 = vperm.slane %v98, 0
    %v241 = vunpack.c.l.b16 %v208
    %v242 = vunpack.c.l.b16 %v209
    %v243 = vunpack.c.l.b16 %v210
    %v244 = vunpack.c.l.b16 %v211
    %v245 = vunpack.c.l.b16 %v212
    %v246 = vunpack.c.l.b16 %v213
    %v247 = vunpack.c.l.b16 %v214
    %v248 = vunpack.c.l.b16 %v215
    %v249 = vunpack.c.l.b16 %v216
    %v250 = vunpack.c.l.b16 %v217
    %v251 = vunpack.c.l.b16 %v218
    %v252 = vunpack.c.l.b16 %v219
    %v253 = vunpack.c.l.b16 %v220
    %v254 = vunpack.c.l.b16 %v221
    %v255 = vunpack.c.l.b16 %v222
    %v256 = vunpack.c.l.b16 %v223
    %v257 = vpack.c.b16 %v242, %v241
    %v258 = vpack.c.b16 %v244, %v243
    %v259 = vpack.c.b16 %v246, %v245
    %v260 = vpack.c.b16 %v248, %v247
    %v261 = vpack.c.b16 %v250, %v249
    %v262 = vpack.c.b16 %v252, %v251
    %v263 = vpack.c.b16 %v254, %v253
    %v264 = vpack.c.b16 %v256, %v255
    %273 = vmatpush.bf16.msra.mxu0 %v264
    %274 = vmatpush.bf16.msra.mxu0 %v263
    %275 = vmatpush.bf16.msra.mxu0 %v262
    %276 = vmatpush.bf16.msra.mxu0 %v261
    %277 = vmatpush.bf16.msra.mxu0 %v260
    %278 = vmatpush.bf16.msra.mxu0 %v259
    %279 = vmatpush.bf16.msra.mxu0 %v258
    %280 = vmatpush.bf16.msra.mxu0 %v257
    %281 = vmatmul.bf16.gmra.mxu0 %v207
    %v282 = vpop.f32.mrf.mxu0
    %v283 = vadd.f32 %v224, %v282
    %v284 = vpop.f32.mrf.mxu0
    %285 = vdwg.mxu0
    %v286 = vlaneseq
    %v287 = vand.u32 %v286, 127
    %vm288 = vcmp.lt.s32.totalorder %v287, 4
    %v289 = vsel %vm288, %v283, -1e+30
    %290 = vmax.xlane.f32.xlu0 %v289
    %v291 = vpop.xlane.xlu0 %290
    %v292 = vsub.f32 %v289, %v291
    %v293 = vmul.f32 %v292, 1.442695
    %v294 = vpow.pop %v293
    %295 = vadd.xlane.f32.xlu0 %v294
    %v296 = vpop.xlane.xlu0 %295
    %v297 = vrcp.pop %v296
    %v298 = vmul.f32 %v296, %v297
    %v299 = vsub.f32 2.0, %v298
    %v300 = vmul.f32 %v297, %v299
    %v301 = vmul.f32 %v294, %v300
    %vm302 = vcmp.eq.s32.totalorder %v287, 4
    %v303 = vsel %vm302, %v283, %v301
    %304 = vst [vmem:[%s5] sm:$0xff] %v303
    // Predicated region
    $region42: #{actor_critic_forward.1} parent=1 // pred_check
      _
    $region43: #{actor_critic_forward.1} parent=1 // pred_check_branch
      %306 = sbr.rel (0) target = $region45
    $region44: #{actor_critic_forward.1} parent=1 // pred_region
      _
    $region45: #{actor_critic_forward.1} parent=1 // pred_fallthru
      _
    // Predicated region
    $region46: #{actor_critic_forward.1} parent=1 // pred_check
      _
    $region47: #{actor_critic_forward.1} parent=1 // pred_check_branch
      %308 = sbr.rel (0) target = $region49
    $region48: #{actor_critic_forward.1} parent=1 // pred_region
      _
    $region49: #{actor_critic_forward.1} parent=1 // pred_fallthru
      _
    %309 = vsyncpa [#allocation3], 1
    %310 = vsyncpa [#allocation5], 1
    %311 = vsyncpa [#allocation8], 1

</llo_original>
